<compile_context>
chip_gen: v5e
topology: v5e:2x2
jax: 0.10.0
libtpu: 0.0.40
codegen_flags: <defaults>
</compile_context>

<pallas_src>
import numpy as np
import jax
import jax.numpy as jnp
from jax.experimental import pallas as pl
from jax.experimental.pallas import tpu as pltpu

_MAX_NUM_BATCHES = 1024   # lane capacity (multiple of 128); fixed -> single compile
_META_SUBLANES = 8        # full int32 vreg tile (8, 128) -> unmasked store


def _clip_batching_meta_kernel(params_ref, meta_ref):
    """params_ref: (2,) int32 SMEM = [num_clips, batch_size].
    meta_ref: (8, MAX_NUM_BATCHES) int32 VMEM, lane-dense over batches.
        row 0 -> batch ids, row 1 -> clips in that batch, rows 2..7 don't-care.
    """
    num_clips = params_ref[0]
    batch_size = params_ref[1]
    shape = meta_ref.shape                                  # (8, MAX_NUM_BATCHES)
    bid = jax.lax.broadcasted_iota(jnp.int32, shape, 1)     # batch index per lane
    row = jax.lax.broadcasted_iota(jnp.int32, shape, 0)     # sublane (row) index
    rem = num_clips - bid * batch_size                      # clips remaining at this batch
    nclips = jnp.minimum(jnp.maximum(rem, 0), batch_size)   # min(batch_size, remaining)
    # Single full-tile, unmasked, lane-dense vector store.
    meta_ref[...] = jnp.where(row == 0, bid, nclips)


@jax.jit
def _clip_batching_meta(params):
    # No static args, fixed shapes -> exactly one compile regardless of video length.
    return pl.pallas_call(
        _clip_batching_meta_kernel,
        out_shape=jax.ShapeDtypeStruct((_META_SUBLANES, _MAX_NUM_BATCHES), jnp.int32),
        in_specs=[pl.BlockSpec(memory_space=pltpu.MemorySpace.SMEM)],
        out_specs=pl.BlockSpec(memory_space=pltpu.MemorySpace.VMEM),
    )(params)


def clip_batching_forward(result: dict, batch_size: int) -> dict:
    """JAX/Pallas equivalent of ClipBatching.forward (frame data stays on host)."""
    frame_indices = np.asarray(result['meta']['frame_indices'])
    clip_len = int(result['meta']['clip_len'])

    num_clips = frame_indices.shape[0] // clip_len
    num_batches = -(-num_clips // batch_size) if num_clips > 0 else 0

    if 0 < num_batches <= _MAX_NUM_BATCHES:
        params = jnp.array([num_clips, batch_size], dtype=jnp.int32)
        meta = jax.block_until_ready(_clip_batching_meta(params))
        meta_host = np.asarray(meta)                         # 32 KB D2H, shape-static
        bids = meta_host[0, :num_batches]
        nclips = meta_host[1, :num_batches]
    else:
        # Empty input or beyond kernel capacity: trivial host fallback.
        bids = np.arange(num_batches, dtype=np.int32)
        nclips = np.minimum(batch_size, num_clips - bids * batch_size).astype(np.int32) \
            if num_batches else np.zeros((0,), np.int32)

    L = batch_size * clip_len
    batch_data_list = []
    for b in range(num_batches):
        start = b * L
        # Slice the ORIGINAL host array (view, zero copy) — identical to the
        # reference, including partial-clip tail elements in the last batch.
        bfi = frame_indices[start:start + L]
        batch_data_list.append({
            'batch_id': int(bids[b]),
            'frame_indices': bfi,
            'num_clips': int(nclips[b]),
        })
    result['meta']['batch_data'] = batch_data_list
    result['meta'].pop('frame_indices')
    return result


def _reference_forward(result: dict, batch_size: int) -> dict:
    """Pure-numpy replica of the PyTorch module (for verification)."""
    frame_indices = np.asarray(result['meta']['frame_indices'])
    clip_len = int(result['meta']['clip_len'])
    num_clips = frame_indices.shape[0] // clip_len
    batch_data_list = []
    for batch_id, start in enumerate(range(0, num_clips, batch_size)):
        bfi = frame_indices[start * clip_len:(start + batch_size) * clip_len]
        batch_data_list.append({
            'batch_id': batch_id,
            'frame_indices': bfi,
            'num_clips': bfi.shape[0] // clip_len,
        })
    result['meta']['batch_data'] = batch_data_list
    result['meta'].pop('frame_indices')
    return result


if __name__ == "__main__":
    key = jax.random.PRNGKey(0)

    configs = [
        # (clip_len, total_frame_index_count, batch_size)
        (8, 5 * 8, 2),       # 3 batches, last one ragged (1 clip)
        (8, 6 * 8, 3),       # 2 full batches
        (8, 5 * 8 + 3, 2),   # partial-clip tail: last batch includes tail elements
    ]
    for clip_len, total_len, batch_size in configs:
        key, sub = jax.random.split(key)
        frame_indices = np.asarray(
            jax.random.randint(sub, (total_len,), 0, 1000, dtype=jnp.int32)
        )

        result = {'meta': {'frame_indices': frame_indices.copy(), 'clip_len': clip_len}}
        ref_result = {'meta': {'frame_indices': frame_indices.copy(), 'clip_len': clip_len}}

        out = clip_batching_forward(result, batch_size)
        ref = _reference_forward(ref_result, batch_size)

        assert len(out['meta']['batch_data']) == len(ref['meta']['batch_data'])
        for got, exp in zip(out['meta']['batch_data'], ref['meta']['batch_data']):
            assert got['batch_id'] == exp['batch_id']
            assert got['num_clips'] == exp['num_clips']
            np.testing.assert_array_equal(got['frame_indices'], exp['frame_indices'])
        assert 'frame_indices' not in out['meta']

    print("KERNEL_OK")
</pallas_src>

<mosaic_0001>
module attributes {stable_mosaic.version = 11 : i64} {
  func.func @_clip_batching_meta_kernel(%arg0: memref<2xi32, #tpu.memory_space<smem>>, %arg1: memref<8x1024xi32, #tpu.memory_space<vmem>>) attributes {dimension_semantics = [], scalar_prefetch = 0 : i64, scratch_operands = 0 : i64, tpu.core_type = #tpu.core_type<tc>} {
    %c0 = arith.constant 0 : index
    %0 = memref.load %arg0[%c0] : memref<2xi32, #tpu.memory_space<smem>>
    %c1 = arith.constant 1 : index
    %1 = memref.load %arg0[%c1] : memref<2xi32, #tpu.memory_space<smem>>
    %2 = tpu.iota {dimensions = array<i32: 1>} : vector<8x1024xi32>
    %3 = tpu.iota {dimensions = array<i32: 0>} : vector<8x1024xi32>
    %4 = vector.broadcast %1 : i32 to vector<8x1024xi32>
    %5 = arith.muli %2, %4 : vector<8x1024xi32>
    %6 = vector.broadcast %0 : i32 to vector<8x1024xi32>
    %7 = arith.subi %6, %5 : vector<8x1024xi32>
    %c0_i32 = arith.constant 0 : i32
    %8 = vector.broadcast %c0_i32 : i32 to vector<8x1024xi32>
    %9 = arith.maxsi %7, %8 : vector<8x1024xi32>
    %10 = vector.broadcast %1 : i32 to vector<8x1024xi32>
    %11 = arith.minsi %9, %10 : vector<8x1024xi32>
    %c0_i32_0 = arith.constant 0 : i32
    %12 = vector.broadcast %c0_i32_0 : i32 to vector<8x1024xi32>
    %13 = arith.cmpi eq, %3, %12 : vector<8x1024xi32>
    %14 = arith.select %13, %2, %11 : vector<8x1024xi1>, vector<8x1024xi32>
    %c0_1 = arith.constant 0 : index
    %c0_2 = arith.constant 0 : index
    %15 = vector.load %arg1[%c0_1, %c0_2] : memref<8x1024xi32, #tpu.memory_space<vmem>>, vector<8x1024xi32>
    tpu.vector_store %arg1[%c0_1, %c0_2], %14 {strides = array<i32>} : memref<8x1024xi32, #tpu.memory_space<vmem>>, vector<8x1024xi32>,
    return
  }
}

</mosaic_0001>

<llo_original>
// kernel: _clip_batching_meta.1
$region0: #{_clip_batching_meta.1}
  #allocation0 [shape = 'u32[]', space=smem, size = 0x4, offset = 0x4, fixed_abs, tag = 'smem constant byte address 0x4 - core index']
  #allocation1 [shape = 'u32[72,128]{1,0:T(1,128)}', space=vmem, size = 0x9000, scoped, tag = 'internal scratch']
  %s0 = inlined_call_operand.hbm [shape: s32[2], index: 0, kind: input, shape index: {}]
  %s1 = inlined_call_operand.hbm [shape: s32[8,1024], index: 1, kind: output, shape index: {}]
  %s2 = sld [smem:[#allocation0]]
  $region18: #{_clip_batching_meta.1} parent=0
    _
  %s4 = ssub.s32 1, %s2
  %s5 = scalar_select 0, %s4, %s2
  $region1: #{_clip_batching_meta.1} parent=0
    #allocation2 [shape = 'u8[512]{0}', space=smem, size = 0x200, scoped, tag = 'input window, operand 0, single buffered']
    #allocation3 [shape = 's32[1]{0}', space=sflag, size = 0x4, scoped, tag = 'scoped memory for _clip_batching_meta.1']
    #allocation4 [shape = 's32[1]{0}', space=sflag, size = 0x4, scoped, tag = 'scoped memory for _clip_batching_meta.1']
    #allocation5 [shape = 'u8[32768]{0}', space=vmem, size = 0x8000, scoped, tag = 'output window, operand 0, single buffered']
    %6 = vsyncpa [#allocation4], 0
    %7 = vsyncpa [#allocation3], 0
    // Predicated region
    $region2: #{_clip_batching_meta.1} parent=1 // pred_check
      _
    $region3: #{_clip_batching_meta.1} parent=1 // pred_check_branch
      %9 = sbr.rel (0) target = $region5
    $region4: #{_clip_batching_meta.1} parent=1 // pred_region
      %11 = vsyncadd [#allocation4], 0
      %s13 = sshll.u32 %s0, 4
      %s14 = int_to_ptr.hbm [resolvable:$true] %s13
      %16 = dma.hbm_to_smem %s14, 16, [#allocation2], [#allocation4]
    $region5: #{_clip_batching_meta.1} parent=1 // pred_fallthru
      _
    // Predicated region
    $region6: #{_clip_batching_meta.1} parent=1 // pred_check
      _
    $region7: #{_clip_batching_meta.1} parent=1 // pred_check_branch
      %18 = sbr.rel (0) target = $region9
    $region8: #{_clip_batching_meta.1} parent=1 // pred_region
      %20 = dma.done [#allocation4], 16
    $region9: #{_clip_batching_meta.1} parent=1 // pred_fallthru
      _
    %21 = sfence
    %s22 = sld [smem:[#allocation2]]
    %s23 = sld [smem:[#allocation2 + $0x1]]
    %v24 = vlaneseq
    %v25 = vand.u32 %v24, 127
    %v26 = vadd.s32 %v25, 128
    %v27 = vadd.s32 %v25, 256
    %v28 = vadd.s32 %v25, 384
    %v29 = vadd.s32 %v25, 512
    %v30 = vadd.s32 %v25, 640
    %v31 = vadd.s32 %v25, 768
    %v32 = vadd.s32 %v25, 896
    %v33 = vlaneseq
    %v34 = vshrl.u32 %v33, 7
    %v35 = vstv %s23
    %v36 = vmul.u32 %v25, %v35
    %v37 = vmul.u32 %v26, %v35
    %v38 = vmul.u32 %v27, %v35
    %v39 = vmul.u32 %v28, %v35
    %v40 = vmul.u32 %v29, %v35
    %v41 = vmul.u32 %v30, %v35
    %v42 = vmul.u32 %v31, %v35
    %v43 = vmul.u32 %v32, %v35
    %v44 = vstv %s22
    %v45 = vsub.s32 %v44, %v36
    %v46 = vsub.s32 %v44, %v37
    %v47 = vsub.s32 %v44, %v38
    %v48 = vsub.s32 %v44, %v39
    %v49 = vsub.s32 %v44, %v40
    %v50 = vsub.s32 %v44, %v41
    %v51 = vsub.s32 %v44, %v42
    %v52 = vsub.s32 %v44, %v43
    %vm53 = vcmp.gt.s32.totalorder %v45, 0
    %v54 = vsel %vm53, %v45, 0
    %vm55 = vcmp.gt.s32.totalorder %v46, 0
    %v56 = vsel %vm55, %v46, 0
    %vm57 = vcmp.gt.s32.totalorder %v47, 0
    %v58 = vsel %vm57, %v47, 0
    %vm59 = vcmp.gt.s32.totalorder %v48, 0
    %v60 = vsel %vm59, %v48, 0
    %vm61 = vcmp.gt.s32.totalorder %v49, 0
    %v62 = vsel %vm61, %v49, 0
    %vm63 = vcmp.gt.s32.totalorder %v50, 0
    %v64 = vsel %vm63, %v50, 0
    %vm65 = vcmp.gt.s32.totalorder %v51, 0
    %v66 = vsel %vm65, %v51, 0
    %vm67 = vcmp.gt.s32.totalorder %v52, 0
    %v68 = vsel %vm67, %v52, 0
    %vm69 = vcmp.lt.s32.totalorder %v54, %v35
    %v70 = vsel %vm69, %v54, %v35
    %vm71 = vcmp.lt.s32.totalorder %v56, %v35
    %v72 = vsel %vm71, %v56, %v35
    %vm73 = vcmp.lt.s32.totalorder %v58, %v35
    %v74 = vsel %vm73, %v58, %v35
    %vm75 = vcmp.lt.s32.totalorder %v60, %v35
    %v76 = vsel %vm75, %v60, %v35
    %vm77 = vcmp.lt.s32.totalorder %v62, %v35
    %v78 = vsel %vm77, %v62, %v35
    %vm79 = vcmp.lt.s32.totalorder %v64, %v35
    %v80 = vsel %vm79, %v64, %v35
    %vm81 = vcmp.lt.s32.totalorder %v66, %v35
    %v82 = vsel %vm81, %v66, %v35
    %vm83 = vcmp.lt.s32.totalorder %v68, %v35
    %v84 = vsel %vm83, %v68, %v35
    %vm85 = vcmp.eq.s32.totalorder %v34, 0
    %v86 = vsel %vm85, %v25, %v70
    %v87 = vsel %vm85, %v26, %v72
    %v88 = vsel %vm85, %v27, %v74
    %v89 = vsel %vm85, %v28, %v76
    %v90 = vsel %vm85, %v29, %v78
    %v91 = vsel %vm85, %v30, %v80
    %v92 = vsel %vm85, %v31, %v82
    %v93 = vsel %vm85, %v32, %v84
    %94 = vst [vmem:[#allocation5] sm:$0xff] %v86
    %95 = vst [vmem:[#allocation5 + $0x8] sm:$0xff] %v87
    %96 = vst [vmem:[#allocation5 + $0x10] sm:$0xff] %v88
    %97 = vst [vmem:[#allocation5 + $0x18] sm:$0xff] %v89
    %98 = vst [vmem:[#allocation5 + $0x20] sm:$0xff] %v90
    %99 = vst [vmem:[#allocation5 + $0x28] sm:$0xff] %v91
    %100 = vst [vmem:[#allocation5 + $0x30] sm:$0xff] %v92
    %101 = vst [vmem:[#allocation5 + $0x38] sm:$0xff] %v93
    // Predicated region
    $region10: #{_clip_batching_meta.1} parent=1 // pred_check
      _
    $region11: #{_clip_batching_meta.1} parent=1 // pred_check_branch
      %103 = sbr.rel (0) target = $region13
    $region12: #{_clip_batching_meta.1} parent=1 // pred_region
      %105 = vsyncadd [#allocation3], 0
      %s107 = sshll.u32 [#allocation5], 4
      %s108 = int_to_ptr.vmem [resolvable:$true] %s107
      %s109 = sshll.u32 %s1, 4
      %s110 = int_to_ptr.hbm [resolvable:$true] %s109
      %112 = dma.vmem_to_hbm [thread:$0]  %s108, 1024, %s110, [#allocation3]
    $region13: #{_clip_batching_meta.1} parent=1 // pred_fallthru
      _
    // Predicated region
    $region14: #{_clip_batching_meta.1} parent=1 // pred_check
      _
    $region15: #{_clip_batching_meta.1} parent=1 // pred_check_branch
      %114 = sbr.rel (0) target = $region17
    $region16: #{_clip_batching_meta.1} parent=1 // pred_region
      %116 = dma.done [#allocation3], 1024
    $region17: #{_clip_batching_meta.1} parent=1 // pred_fallthru
      _
    %117 = vsyncpa [#allocation3], 1
    %118 = vsyncpa [#allocation4], 1

</llo_original>
